<compile_context>
chip_gen: v5e
topology: v5e:2x2
jax: 0.10.0
libtpu: 0.0.40
codegen_flags: <defaults>
</compile_context>

<pallas_src>
import jax
import jax.numpy as jnp
from jax import lax
from jax.experimental import pallas as pl
from jax.experimental.pallas import tpu as pltpu

BN_EPS = 1e-5


def _round_up(x, m):
    return ((x + m - 1) // m) * m


# ---------------------------------------------------------------------------
# Fused kernel: grid = (2, n_vocab_tiles)
#   phase 0: linear + batchnorm per tile -> VMEM scratch, online lse
#   phase 1: subtract lse, emit output tile
# ---------------------------------------------------------------------------
def _make_fused_kernel(v_valid, tile_v, padded):
    def kernel(x_ref, w_ref, b_ref, o_ref, yn_sc, m_sc, l_sc):
        p = pl.program_id(0)          # 0: compute + accumulate, 1: emit
        j = pl.program_id(1)          # vocab tile index
        n_j = pl.num_programs(1)

        @pl.when(jnp.logical_and(p == 0, j == 0))
        def _init():
            m_sc[...] = jnp.full_like(m_sc, -jnp.inf)
            l_sc[...] = jnp.zeros_like(l_sc)

        @pl.when(p == 0)
        def _compute():
            # Linear: [B, T] @ [T, TV] -> [B, TV] on the MXU, f32 accumulate.
            y = jnp.dot(x_ref[...], w_ref[...],
                        preferred_element_type=jnp.float32)
            y = y + b_ref[...].astype(jnp.float32)

            # BatchNorm1d (training mode, affine=False): exact per-column batch
            # stats (each V tile sees the FULL batch), biased var, eps = 1e-5.
            mean = jnp.mean(y, axis=0, keepdims=True)        # [1, TV]
            d = y - mean
            var = jnp.mean(d * d, axis=0, keepdims=True)     # [1, TV]
            y_norm = d * lax.rsqrt(var + BN_EPS)             # [B, TV]

            # Park normalized activations in VMEM (no HBM round trip).
            yn_sc[j] = y_norm

            # Online row-max / sum-exp across V tiles (padded vocab columns
            # masked to -inf so they never enter the softmax denominator).
            if padded:
                col = j * tile_v + lax.broadcasted_iota(
                    jnp.int32, y_norm.shape, 1)
                y_sm = jnp.where(col < v_valid, y_norm, -jnp.inf)
            else:
                y_sm = y_norm

            tile_max = jnp.max(y_sm, axis=1, keepdims=True)  # [B, 1]
            m_new = jnp.maximum(m_sc[...], tile_max)
            l_sc[...] = (l_sc[...] * jnp.exp(m_sc[...] - m_new)
                         + jnp.sum(jnp.exp(y_sm - m_new), axis=1,
                                   keepdims=True))
            m_sc[...] = m_new

            @pl.when(j == n_j - 1)
            def _finalize():
                # Reuse m_sc to hold lse = m + log(l) for phase 1.
                m_sc[...] = m_sc[...] + jnp.log(l_sc[...])

        @pl.when(p == 1)
        def _emit():
            o_ref[...] = (yn_sc[j] - m_sc[...]).astype(o_ref.dtype)

    return kernel


# ---------------------------------------------------------------------------
# Fallback pass 1: linear + batchnorm per V tile, online row-max / sum-exp
# ---------------------------------------------------------------------------
def _make_linear_bn_kernel(v_valid, tile_v, padded):
    def kernel(x_ref, w_ref, b_ref, yn_ref, lse_ref, m_sc, l_sc):
        j = pl.program_id(0)

        @pl.when(j == 0)
        def _init():
            m_sc[...] = jnp.full_like(m_sc, -jnp.inf)
            l_sc[...] = jnp.zeros_like(l_sc)

        y = jnp.dot(x_ref[...], w_ref[...], preferred_element_type=jnp.float32)
        y = y + b_ref[...].astype(jnp.float32)

        mean = jnp.mean(y, axis=0, keepdims=True)
        d = y - mean
        var = jnp.mean(d * d, axis=0, keepdims=True)
        y_norm = d * lax.rsqrt(var + BN_EPS)
        yn_ref[...] = y_norm

        if padded:
            col = j * tile_v + lax.broadcasted_iota(jnp.int32, y_norm.shape, 1)
            y_sm = jnp.where(col < v_valid, y_norm, -jnp.inf)
        else:
            y_sm = y_norm

        tile_max = jnp.max(y_sm, axis=1, keepdims=True)
        m_new = jnp.maximum(m_sc[...], tile_max)
        l_sc[...] = (l_sc[...] * jnp.exp(m_sc[...] - m_new)
                     + jnp.sum(jnp.exp(y_sm - m_new), axis=1, keepdims=True))
        m_sc[...] = m_new

        @pl.when(j == pl.num_programs(0) - 1)
        def _finalize():
            lse_ref[...] = m_sc[...] + jnp.log(l_sc[...])

    return kernel


# ---------------------------------------------------------------------------
# Fallback pass 2: out = y_norm - lse (embarrassingly parallel over V tiles)
# ---------------------------------------------------------------------------
def _subtract_lse_kernel(yn_ref, lse_ref, o_ref):
    o_ref[...] = (yn_ref[...] - lse_ref[...]).astype(o_ref.dtype)


# ---------------------------------------------------------------------------
# wrapper helpers
# ---------------------------------------------------------------------------
def _vmem_limit_bytes():
    try:
        cap = pltpu.get_tpu_info().vmem_capacity_bytes
    except Exception:
        cap = 128 << 20
    # Headroom for compiler-internal scratch / double-buffer slack.
    return max(32 << 20, min(cap * 3 // 4, cap - (16 << 20)))


def _pick_tile_v(V, B, T, budget_bytes, max_tile_v):
    v128 = _round_up(V, 128)
    b8 = _round_up(B, 8)
    t8 = _round_up(T, 8)

    def live_bytes(tv):
        # double-buffered tiled operands (f32-sized): W tile, bias tile,
        # out/yn tile, plus resident x and small scratch.
        return (2 * (t8 * tv + 8 * tv + b8 * tv)
                + 2 * b8 * _round_up(T, 128) + 4 * b8 * 128) * 4

    tv = min(v128, max(128, (max_tile_v // 128) * 128))
    while tv > 128 and live_bytes(tv) > budget_bytes:
        tv -= 128
    return tv


def _fused_fits(B, T, tile_v, n_tiles, budget_bytes):
    b8 = _round_up(B, 8)
    t8 = _round_up(T, 8)
    scratch = n_tiles * b8 * tile_v * 4 + 4 * b8 * 128 * 4      # yn + m/l
    per_tile = 2 * (t8 * tile_v + 8 * tile_v + b8 * tile_v) * 4  # dbl-buffered
    resident = 2 * b8 * _round_up(T, 128) * 4                    # x
    return scratch + per_tile + resident <= budget_bytes


# ---------------------------------------------------------------------------
# wrapper
# ---------------------------------------------------------------------------
def decoder_forward(x, weight, bias, *, out_dtype=jnp.float32,
                    max_tile_v=8192, allow_fused=True):
    """x: [B, num_topics], weight: [vocab, num_topics] (PyTorch layout), bias: [vocab]."""
    B, T = x.shape
    V, T2 = weight.shape
    assert T == T2 and bias.shape == (V,)

    # One-time relayout OUTSIDE the kernel: [T, V] is lane-dense in V and feeds
    # the MXU in its natural [K, N] orientation.
    w_t = weight.T
    bias2d = bias.reshape(1, V)

    vmem_limit = _vmem_limit_bytes()
    tile_v = _pick_tile_v(V, B, T, vmem_limit // 2, max_tile_v)
    n_tiles = pl.cdiv(V, tile_v)
    v_pad = n_tiles * tile_v
    padded = v_pad != V
    if padded:
        # Zero-padded vocab columns: y == 0 there, BN keeps them finite, the
        # kernels mask them to -inf before the softmax reduction.
        w_t = jnp.pad(w_t, ((0, 0), (0, v_pad - V)))
        bias2d = jnp.pad(bias2d, ((0, 0), (0, v_pad - V)))

    f32 = jnp.float32
    use_fused = allow_fused and _fused_fits(B, T, tile_v, n_tiles,
                                            vmem_limit - (4 << 20))

    if use_fused:
        # -------- single fused call: no HBM round trip of the intermediate ----
        out = pl.pallas_call(
            _make_fused_kernel(V, tile_v, padded),
            out_shape=jax.ShapeDtypeStruct((B, v_pad), out_dtype),
            grid_spec=pltpu.PrefetchScalarGridSpec(
                num_scalar_prefetch=0,
                grid=(2, n_tiles),
                in_specs=[
                    pl.BlockSpec((B, T), lambda p, j: (0, 0)),          # x resident
                    pl.BlockSpec((T, tile_v),
                                 lambda p, j: (0, j * (1 - p))),        # W^T tile (phase 0 only)
                    pl.BlockSpec((1, tile_v),
                                 lambda p, j: (0, j * (1 - p))),        # bias tile
                ],
                # Pin the output block during phase 0 (no garbage writeback);
                # stream real tiles during phase 1.
                out_specs=pl.BlockSpec((B, tile_v),
                                       lambda p, j: (0, j * (1 - (1 - p)))
                                       if False else (0, j * p)),
                scratch_shapes=[
                    pltpu.VMEM((n_tiles, B, tile_v), f32),  # normalized activations
                    pltpu.VMEM((B, 1), f32),                # running max -> lse
                    pltpu.VMEM((B, 1), f32),                # running sum-exp
                ],
            ),
            compiler_params=pltpu.CompilerParams(
                dimension_semantics=("arbitrary", "arbitrary"),
                vmem_limit_bytes=vmem_limit),
            cost_estimate=pl.CostEstimate(
                flops=int(2 * B * v_pad * T + 12 * B * v_pad),
                transcendentals=int(B * v_pad + 2 * B),
                bytes_accessed=int(4 * (B * T + T * v_pad + v_pad + B * v_pad))),
        )(x, w_t, bias2d)

        if padded:
            out = out[:, :V]
        return out

    # -------- fallback: two-call pipeline (large B*V) --------------------------
    y_norm, lse = pl.pallas_call(
        _make_linear_bn_kernel(V, tile_v, padded),
        out_shape=(jax.ShapeDtypeStruct((B, v_pad), f32),
                   jax.ShapeDtypeStruct((B, 1), f32)),
        grid_spec=pltpu.PrefetchScalarGridSpec(
            num_scalar_prefetch=0,
            grid=(n_tiles,),
            in_specs=[
                pl.BlockSpec((B, T), lambda j: (0, 0)),
                pl.BlockSpec((T, tile_v), lambda j: (0, j)),
                pl.BlockSpec((1, tile_v), lambda j: (0, j)),
            ],
            out_specs=(
                pl.BlockSpec((B, tile_v), lambda j: (0, j)),
                pl.BlockSpec((B, 1), lambda j: (0, 0)),
            ),
            scratch_shapes=[pltpu.VMEM((B, 1), f32),
                            pltpu.VMEM((B, 1), f32)],
        ),
        compiler_params=pltpu.CompilerParams(
            dimension_semantics=("arbitrary",),
            vmem_limit_bytes=vmem_limit),
        cost_estimate=pl.CostEstimate(
            flops=int(2 * B * v_pad * T + 10 * B * v_pad),
            transcendentals=int(B * v_pad + 2 * B),
            bytes_accessed=int(4 * (B * T + T * v_pad + v_pad + B * v_pad + B))),
    )(x, w_t, bias2d)

    out = pl.pallas_call(
        _subtract_lse_kernel,
        out_shape=jax.ShapeDtypeStruct((B, v_pad), out_dtype),
        grid_spec=pltpu.PrefetchScalarGridSpec(
            num_scalar_prefetch=0,
            grid=(n_tiles,),
            in_specs=[
                pl.BlockSpec((B, tile_v), lambda j: (0, j)),
                pl.BlockSpec((B, 1), lambda j: (0, 0)),
            ],
            out_specs=pl.BlockSpec((B, tile_v), lambda j: (0, j)),
        ),
        compiler_params=pltpu.CompilerParams(
            dimension_semantics=("parallel",),
            vmem_limit_bytes=vmem_limit),
        cost_estimate=pl.CostEstimate(
            flops=int(B * v_pad),
            transcendentals=0,
            bytes_accessed=int(4 * (2 * B * v_pad + B))),
    )(y_norm, lse)

    if padded:
        out = out[:, :V]
    return out


def reference_forward(x, weight, bias):
    y = x @ weight.T + bias
    mean = jnp.mean(y, axis=0, keepdims=True)
    var = jnp.mean((y - mean) ** 2, axis=0, keepdims=True)
    yn = (y - mean) / jnp.sqrt(var + BN_EPS)
    return jax.nn.log_softmax(yn, axis=1)


if __name__ == "__main__":
    # Small, module-consistent shapes.  vocab_size=384 with max_tile_v=256
    # exercises the multi-tile online log-sum-exp AND the padded-column mask.
    batch = 8
    num_topics = 16
    vocab_size = 384

    key = jax.random.PRNGKey(0)
    kx, kw, kb = jax.random.split(key, 3)

    # Deterministic parameter init (synthetic; mirrors nn.Linear's
    # uniform(-1/sqrt(fan_in), 1/sqrt(fan_in)) scale).
    bound = 1.0 / (num_topics ** 0.5)
    weight = jax.random.uniform(kw, (vocab_size, num_topics),
                                minval=-bound, maxval=bound, dtype=jnp.float32)
    bias = jax.random.uniform(kb, (vocab_size,),
                              minval=-bound, maxval=bound, dtype=jnp.float32)

    # Example inputs (topic proportions / latent draws).
    x = jax.random.normal(kx, (batch, num_topics), dtype=jnp.float32)

    ref = reference_forward(x, weight, bias)

    # Fused single-call path (default) and two-call fallback, both checked.
    out_fused = jax.block_until_ready(
        decoder_forward(x, weight, bias, max_tile_v=256))
    out_twopass = jax.block_until_ready(
        decoder_forward(x, weight, bias, max_tile_v=256, allow_fused=False))

    for out in (out_fused, out_twopass):
        assert out.shape == (batch, vocab_size)
        err = jnp.max(jnp.abs(out - ref))
        assert jnp.allclose(out, ref, atol=1e-4, rtol=1e-4), f"max abs err {err}"

    print("KERNEL_OK")
</pallas_src>

<mosaic_0001>
module attributes {stable_mosaic.version = 11 : i64} {
  func.func @kernel(%arg0: i32, %arg1: i32, %arg2: memref<8x16xf32, #tpu.memory_space<vmem>>, %arg3: memref<16x256xf32, #tpu.memory_space<vmem>>, %arg4: memref<1x256xf32, #tpu.memory_space<vmem>>, %arg5: memref<8x256xf32, #tpu.memory_space<vmem>>, %arg6: memref<2x8x256xf32, #tpu.memory_space<vmem>>, %arg7: memref<8x1xf32, #tpu.memory_space<vmem>>, %arg8: memref<8x1xf32, #tpu.memory_space<vmem>>) attributes {dimension_semantics = [#tpu.dimension_semantics<arbitrary>, #tpu.dimension_semantics<arbitrary>], iteration_bounds = array<i64: 2, 2>, scalar_prefetch = 0 : i64, scratch_operands = 3 : i64, tpu.core_type = #tpu.core_type<tc>, window_params = [{pipeline_mode = #tpu.pipeline_mode<synchronous>, transform_indices = @transform_0, window_bounds = array<i64: 8, 16>}, {transform_indices = @transform_1, window_bounds = array<i64: 16, 256>}, {transform_indices = @transform_2, window_bounds = array<i64: 1, 256>}, {transform_indices = @transform_3, window_bounds = array<i64: 8, 256>}]} {
    %c0_i32 = arith.constant 0 : i32
    %0 = arith.cmpi eq, %arg0, %c0_i32 : i32
    %c0_i32_0 = arith.constant 0 : i32
    %1 = arith.cmpi eq, %arg1, %c0_i32_0 : i32
    %2 = arith.andi %0, %1 : i1
    %3 = arith.extui %2 : i1 to i32
    %c0_i32_1 = arith.constant 0 : i32
    %4 = arith.cmpi ne, %3, %c0_i32_1 : i32
    scf.if %4 {
      %cst = arith.constant 0xFF800000 : f32
      %11 = vector.broadcast %cst : f32 to vector<8x1xf32>
      %c0 = arith.constant 0 : index
      %c0_5 = arith.constant 0 : index
      %12 = vector.load %arg7[%c0, %c0_5] : memref<8x1xf32, #tpu.memory_space<vmem>>, vector<8x1xf32>
      tpu.vector_store %arg7[%c0, %c0_5], %11 {strides = array<i32>} : memref<8x1xf32, #tpu.memory_space<vmem>>, vector<8x1xf32>,
      %cst_6 = arith.constant 0.000000e+00 : f32
      %13 = vector.broadcast %cst_6 : f32 to vector<8x1xf32>
      %c0_7 = arith.constant 0 : index
      %c0_8 = arith.constant 0 : index
      %14 = vector.load %arg8[%c0_7, %c0_8] : memref<8x1xf32, #tpu.memory_space<vmem>>, vector<8x1xf32>
      tpu.vector_store %arg8[%c0_7, %c0_8], %13 {strides = array<i32>} : memref<8x1xf32, #tpu.memory_space<vmem>>, vector<8x1xf32>,
    } else {
    }
    %c0_i32_2 = arith.constant 0 : i32
    %5 = arith.cmpi eq, %arg0, %c0_i32_2 : i32
    %6 = arith.extui %5 : i1 to i32
    %c0_i32_3 = arith.constant 0 : i32
    %7 = arith.cmpi ne, %6, %c0_i32_3 : i32
    scf.if %7 {
      %c0 = arith.constant 0 : index
      %c0_5 = arith.constant 0 : index
      %11 = vector.load %arg2[%c0, %c0_5] : memref<8x16xf32, #tpu.memory_space<vmem>>, vector<8x16xf32>
      %c0_6 = arith.constant 0 : index
      %c0_7 = arith.constant 0 : index
      %12 = vector.load %arg3[%c0_6, %c0_7] : memref<16x256xf32, #tpu.memory_space<vmem>>, vector<16x256xf32>
      %cst = arith.constant dense<0.000000e+00> : vector<8x256xf32>
      %13 = tpu.matmul %11, %12, %cst {dimension_numbers = #tpu.dot_dimension_numbers<[1], [0], [0], [1], [0, 0, 1, 1], [], []>} : vector<8x16xf32>, vector<16x256xf32>, vector<8x256xf32> -> vector<8x256xf32>
      %c0_8 = arith.constant 0 : index
      %c0_9 = arith.constant 0 : index
      %14 = vector.load %arg4[%c0_8, %c0_9] : memref<1x256xf32, #tpu.memory_space<vmem>>, vector<1x256xf32>
      %15 = vector.broadcast %14 : vector<1x256xf32> to vector<8x256xf32>
      %16 = arith.addf %13, %15 : vector<8x256xf32>
      %cst_10 = arith.constant dense<0.000000e+00> : vector<256xf32>
      %17 = vector.multi_reduction <add>, %16, %cst_10 [0] : vector<8x256xf32> to vector<256xf32>
      %18 = vector.shape_cast %17 : vector<256xf32> to vector<1x256xf32>
      %cst_11 = arith.constant 8.000000e+00 : f32
      %19 = vector.broadcast %cst_11 : f32 to vector<1x256xf32>
      %20 = arith.divf %18, %19 : vector<1x256xf32>
      %21 = vector.broadcast %20 : vector<1x256xf32> to vector<8x256xf32>
      %22 = arith.subf %16, %21 : vector<8x256xf32>
      %23 = arith.mulf %22, %22 : vector<8x256xf32>
      %cst_12 = arith.constant dense<0.000000e+00> : vector<256xf32>
      %24 = vector.multi_reduction <add>, %23, %cst_12 [0] : vector<8x256xf32> to vector<256xf32>
      %25 = vector.shape_cast %24 : vector<256xf32> to vector<1x256xf32>
      %cst_13 = arith.constant 8.000000e+00 : f32
      %26 = vector.broadcast %cst_13 : f32 to vector<1x256xf32>
      %27 = arith.divf %25, %26 : vector<1x256xf32>
      %cst_14 = arith.constant 9.99999974E-6 : f32
      %28 = vector.broadcast %cst_14 : f32 to vector<1x256xf32>
      %29 = arith.addf %27, %28 : vector<1x256xf32>
      %30 = math.rsqrt %29 : vector<1x256xf32>
      %31 = vector.broadcast %30 : vector<1x256xf32> to vector<8x256xf32>
      %32 = arith.mulf %22, %31 : vector<8x256xf32>
      %33 = arith.index_cast %arg1 : i32 to index
      %c0_15 = arith.constant 0 : index
      %c0_16 = arith.constant 0 : index
      %34 = vector.load %arg6[%33, %c0_15, %c0_16] : memref<2x8x256xf32, #tpu.memory_space<vmem>>, vector<1x8x256xf32>
      %35 = vector.shape_cast %34 : vector<1x8x256xf32> to vector<8x256xf32>
      %36 = vector.shape_cast %32 : vector<8x256xf32> to vector<1x8x256xf32>
      tpu.vector_store %arg6[%33, %c0_15, %c0_16], %36 {strides = array<i32>} : memref<2x8x256xf32, #tpu.memory_space<vmem>>, vector<1x8x256xf32>,
      %c256_i32 = arith.constant 256 : i32
      %37 = arith.muli %arg1, %c256_i32 : i32
      %38 = tpu.iota {dimensions = array<i32: 1>} : vector<8x256xi32>
      %39 = vector.broadcast %37 : i32 to vector<8x256xi32>
      %40 = arith.addi %39, %38 : vector<8x256xi32>
      %c384_i32 = arith.constant 384 : i32
      %41 = vector.broadcast %c384_i32 : i32 to vector<8x256xi32>
      %42 = arith.cmpi slt, %40, %41 : vector<8x256xi32>
      %cst_17 = arith.constant 0xFF800000 : f32
      %43 = vector.broadcast %cst_17 : f32 to vector<8x256xf32>
      %44 = arith.select %42, %32, %43 : vector<8x256xi1>, vector<8x256xf32>
      %cst_18 = arith.constant dense<0xFF800000> : vector<8xf32>
      %45 = vector.multi_reduction <maximumf>, %44, %cst_18 [1] : vector<8x256xf32> to vector<8xf32>
      %46 = vector.shape_cast %45 : vector<8xf32> to vector<8x1xf32>
      %c0_19 = arith.constant 0 : index
      %c0_20 = arith.constant 0 : index
      %47 = vector.load %arg7[%c0_19, %c0_20] : memref<8x1xf32, #tpu.memory_space<vmem>>, vector<8x1xf32>
      %48 = arith.maximumf %47, %46 : vector<8x1xf32>
      %c0_21 = arith.constant 0 : index
      %c0_22 = arith.constant 0 : index
      %49 = vector.load %arg8[%c0_21, %c0_22] : memref<8x1xf32, #tpu.memory_space<vmem>>, vector<8x1xf32>
      %c0_23 = arith.constant 0 : index
      %c0_24 = arith.constant 0 : index
      %50 = vector.load %arg7[%c0_23, %c0_24] : memref<8x1xf32, #tpu.memory_space<vmem>>, vector<8x1xf32>
      %51 = arith.subf %50, %48 : vector<8x1xf32>
      %52 = math.exp %51 : vector<8x1xf32>
      %53 = arith.mulf %49, %52 : vector<8x1xf32>
      %54 = vector.broadcast %48 : vector<8x1xf32> to vector<8x256xf32>
      %55 = arith.subf %44, %54 : vector<8x256xf32>
      %56 = math.exp %55 : vector<8x256xf32>
      %cst_25 = arith.constant dense<0.000000e+00> : vector<8xf32>
      %57 = vector.multi_reduction <add>, %56, %cst_25 [1] : vector<8x256xf32> to vector<8xf32>
      %58 = vector.shape_cast %57 : vector<8xf32> to vector<8x1xf32>
      %59 = arith.addf %53, %58 : vector<8x1xf32>
      %c0_26 = arith.constant 0 : index
      %c0_27 = arith.constant 0 : index
      %60 = vector.load %arg8[%c0_26, %c0_27] : memref<8x1xf32, #tpu.memory_space<vmem>>, vector<8x1xf32>
      tpu.vector_store %arg8[%c0_26, %c0_27], %59 {strides = array<i32>} : memref<8x1xf32, #tpu.memory_space<vmem>>, vector<8x1xf32>,
      %c0_28 = arith.constant 0 : index
      %c0_29 = arith.constant 0 : index
      %61 = vector.load %arg7[%c0_28, %c0_29] : memref<8x1xf32, #tpu.memory_space<vmem>>, vector<8x1xf32>
      tpu.vector_store %arg7[%c0_28, %c0_29], %48 {strides = array<i32>} : memref<8x1xf32, #tpu.memory_space<vmem>>, vector<8x1xf32>,
      %c1_i32_30 = arith.constant 1 : i32
      %62 = arith.cmpi eq, %arg1, %c1_i32_30 : i32
      %63 = arith.extui %62 : i1 to i32
      %c0_i32_31 = arith.constant 0 : i32
      %64 = arith.cmpi ne, %63, %c0_i32_31 : i32
      scf.if %64 {
        %c0_32 = arith.constant 0 : index
        %c0_33 = arith.constant 0 : index
        %65 = vector.load %arg7[%c0_32, %c0_33] : memref<8x1xf32, #tpu.memory_space<vmem>>, vector<8x1xf32>
        %c0_34 = arith.constant 0 : index
        %c0_35 = arith.constant 0 : index
        %66 = vector.load %arg8[%c0_34, %c0_35] : memref<8x1xf32, #tpu.memory_space<vmem>>, vector<8x1xf32>
        %67 = math.log %66 : vector<8x1xf32>
        %68 = arith.addf %65, %67 : vector<8x1xf32>
        %c0_36 = arith.constant 0 : index
        %c0_37 = arith.constant 0 : index
        %69 = vector.load %arg7[%c0_36, %c0_37] : memref<8x1xf32, #tpu.memory_space<vmem>>, vector<8x1xf32>
        tpu.vector_store %arg7[%c0_36, %c0_37], %68 {strides = array<i32>} : memref<8x1xf32, #tpu.memory_space<vmem>>, vector<8x1xf32>,
      } else {
      }
    } else {
    }
    %c1_i32 = arith.constant 1 : i32
    %8 = arith.cmpi eq, %arg0, %c1_i32 : i32
    %9 = arith.extui %8 : i1 to i32
    %c0_i32_4 = arith.constant 0 : i32
    %10 = arith.cmpi ne, %9, %c0_i32_4 : i32
    scf.if %10 {
      %11 = arith.index_cast %arg1 : i32 to index
      %c0 = arith.constant 0 : index
      %c0_5 = arith.constant 0 : index
      %12 = vector.load %arg6[%11, %c0, %c0_5] : memref<2x8x256xf32, #tpu.memory_space<vmem>>, vector<1x8x256xf32>
      %13 = vector.shape_cast %12 : vector<1x8x256xf32> to vector<8x256xf32>
      %c0_6 = arith.constant 0 : index
      %c0_7 = arith.constant 0 : index
      %14 = vector.load %arg7[%c0_6, %c0_7] : memref<8x1xf32, #tpu.memory_space<vmem>>, vector<8x1xf32>
      %15 = vector.broadcast %14 : vector<8x1xf32> to vector<8x256xf32>
      %16 = arith.subf %13, %15 : vector<8x256xf32>
      %c0_8 = arith.constant 0 : index
      %c0_9 = arith.constant 0 : index
      %17 = vector.load %arg5[%c0_8, %c0_9] : memref<8x256xf32, #tpu.memory_space<vmem>>, vector<8x256xf32>
      tpu.vector_store %arg5[%c0_8, %c0_9], %16 {strides = array<i32>} : memref<8x256xf32, #tpu.memory_space<vmem>>, vector<8x256xf32>,
    } else {
    }
    return
  }
  func.func @transform_0(%arg0: i32, %arg1: i32) -> (i32, i32) {
    %c0_i32 = arith.constant 0 : i32
    %c0_i32_0 = arith.constant 0 : i32
    %c0_i32_1 = arith.constant 0 : i32
    return %c0_i32, %c0_i32_0 : i32, i32
  }
  func.func @transform_1(%arg0: i32, %arg1: i32) -> (i32, i32) {
    %c1_i32 = arith.constant 1 : i32
    %0 = arith.subi %c1_i32, %arg0 : i32
    %1 = arith.muli %arg1, %0 : i32
    %c0_i32 = arith.constant 0 : i32
    %c0_i32_0 = arith.constant 0 : i32
    return %c0_i32, %1 : i32, i32
  }
  func.func @transform_2(%arg0: i32, %arg1: i32) -> (i32, i32) {
    %c1_i32 = arith.constant 1 : i32
    %0 = arith.subi %c1_i32, %arg0 : i32
    %1 = arith.muli %arg1, %0 : i32
    %c0_i32 = arith.constant 0 : i32
    %c0_i32_0 = arith.constant 0 : i32
    return %c0_i32, %1 : i32, i32
  }
  func.func @transform_3(%arg0: i32, %arg1: i32) -> (i32, i32) {
    %0 = arith.muli %arg1, %arg0 : i32
    %c0_i32 = arith.constant 0 : i32
    %c0_i32_0 = arith.constant 0 : i32
    return %c0_i32, %0 : i32, i32
  }
}

</mosaic_0001>

<llo_original>
// kernel: tpu_custom_call.1
$region0: #{tpu_custom_call.1}
  #allocation0 [shape = 'u32[]', space=smem, size = 0x4, offset = 0x4, fixed_abs, tag = 'smem constant byte address 0x4 - core index']
  #allocation1 [shape = 'u32[72,128]{1,0:T(1,128)}', space=vmem, size = 0x9000, scoped, tag = 'internal scratch']
  #allocation2 [shape = 'f32[2,8,256]{2,1,0:T(8,128)}', space=vmem, size = 0x4000, scoped, tag = 'scratch operand']
  #allocation3 [shape = 'f32[8,1]{1,0:T(8,128)}', space=vmem, size = 0x1000, scoped, tag = 'scratch operand']
  #allocation4 [shape = 'f32[8,1]{1,0:T(8,128)}', space=vmem, size = 0x1000, scoped, tag = 'scratch operand']
  %s0 = inlined_call_operand.hbm [shape: f32[8,16], index: 0, kind: input, shape index: {}]
  %s1 = inlined_call_operand.hbm [shape: f32[16,512], index: 1, kind: input, shape index: {}]
  %s2 = inlined_call_operand.hbm [shape: f32[1,512], index: 2, kind: input, shape index: {}]
  %s3 = inlined_call_operand.hbm [shape: f32[8,512], index: 3, kind: output, shape index: {}]
  %s4 = sld [smem:[#allocation0]]
  $region73: #{tpu_custom_call.1} parent=0
    _
  %s6 = ssub.s32 1, %s4
  %s7 = scalar_select 0, %s6, %s4
  $region1: #{tpu_custom_call.1} parent=0
    #allocation5 [shape = 'u8[4096]{0}', space=vmem, size = 0x1000, scoped, tag = 'input window, operand 0, single buffered']
    #allocation6 [shape = 's32[2]{0}', space=sflag, size = 0x8, scoped, tag = 'scoped memory for tpu_custom_call.1']
    #allocation7 [shape = 's32[2]{0}', space=sflag, size = 0x8, scoped, tag = 'scoped memory for tpu_custom_call.1']
    #allocation8 [shape = 'u8[32768]{0}', space=vmem, size = 0x8000, scoped, tag = 'input window, operand 1']
    #allocation9 [shape = 's32[2]{0}', space=sflag, size = 0x8, scoped, tag = 'scoped memory for tpu_custom_call.1']
    #allocation10 [shape = 'u8[2048]{0}', space=vmem, size = 0x800, scoped, tag = 'input window, operand 2']
    #allocation11 [shape = 'u8[16384]{0}', space=vmem, size = 0x4000, scoped, tag = 'output window, operand 0']
    %8 = vsyncpa [#allocation6], 0
    %9 = vsyncpa [#allocation9], 0
    %s10 = scalar_lea.sflag [#allocation9], 1
    %11 = vsyncpa %s10, 0
    %12 = vsyncpa [#allocation7], 0
    %s13 = scalar_lea.sflag [#allocation7], 1
    %14 = vsyncpa %s13, 0
    loop: start=0, step=1, limit=6
    $region2: #{tpu_custom_call.1} parent=1 // loop_pre_header
      _
    $region3: #{tpu_custom_call.1} parent=1 // loop_header
      %s16 = sphi 0, %s20
      %p17 = scmp.ge.s32.totalorder %s16, 6
      %s23 = sphi 0, %s35
      %s24 = sphi 0, %s31
      %s25 = sphi 0, %s23
      %s26 = sphi 0, %s24
      %s27 = sphi 0, %s25
      %s28 = sphi 0, %s26
      %s36 = sphi 0, %s36
      %s38 = sphi 0, %s36
      %s39 = sphi 0, %s38
      %s53 = sphi 0, %s39
      %s63 = sphi 0, %s65
      %s66 = sphi 0, %s63
      %s67 = sphi 0, %s66
      %s83 = sphi 0, %s67
      %s93 = sphi 0, %s95
      %s96 = sphi 0, %s93
      %s97 = sphi 0, %s96
      %s113 = sphi 0, %s97
      %s121 = sphi 0, %s123
      %s124 = sphi 0, %s121
      %s125 = sphi 0, %s124
      %s141 = sphi 0, %s125
    $region4: #{tpu_custom_call.1} parent=1 // loop_header_branch
      %19 = sbr.rel (%p17) target = $region8
    $region5: #{tpu_custom_call.1} parent=1 // loop_body
      %s21 = ssub.s32 %s16, 1
      %s22 = ssub.s32 %s16, 2
      %s29 = sadd.s32 1, %s24
      %p30 = scmp.ge.s32.totalorder %s29, 2
      %s31 = scalar_select %p30, 0, %s29
      %s32 = sadd.s32 1, %s23
      %s33 = scalar_select %p30, %s32, %s23
      %p34 = scmp.ge.s32.totalorder %s33, 2
      %s35 = scalar_select %p34, 0, %s33
      %s37 = sadd.s32 %s36, 1
      %p40 = scmp.eq.s32.totalorder %s16, 3
      %p41 = scmp.ne.s32.totalorder %s36, %s38
      %p42 = scmp.eq.s32.totalorder %s16, 0
      %p43 = por %p41, %p42
      %p44 = scmp.ne.s32.totalorder %s36, %s38
      %p45 = scmp.eq.s32.totalorder %s21, 3
      %p46 = por %p44, %p45
      %p47 = scmp.ne.s32.totalorder %s38, %s39
      %p48 = scmp.eq.s32.totalorder %s21, 0
      %p49 = por %p47, %p48
      %p50 = scmp.ne.s32.totalorder %s38, %s39
      %p51 = scmp.eq.s32.totalorder %s22, 3
      %p52 = por %p50, %p51
      %p54 = scmp.ne.s32.totalorder %s39, %s53
      %p55 = scmp.eq.s32.totalorder %s22, 0
      %p56 = por %p54, %p55
      %s57 = ssub.s32 1, %s23
      %s58 = smul.u32 %s24, %s57
      %s59 = ssub.s32 1, %s35
      %s60 = smul.u32 %s31, %s59
      %s61 = ssub.s32 %s58, %s60
      %p62 = scmp.eq.s32.totalorder %s61, 0
      %s64 = sadd.s32 %s63, 1
      %s65 = scalar_select %p62, %s63, %s64
      %p68 = pneg %p62
      %p69 = scmp.eq.s32.totalorder %s16, 3
      %p70 = por %p68, %p69
      %p71 = scmp.ne.s32.totalorder %s63, %s66
      %p72 = scmp.eq.s32.totalorder %s16, 0
      %p73 = por %p71, %p72
      %p74 = scmp.ne.s32.totalorder %s63, %s66
      %p75 = scmp.eq.s32.totalorder %s21, 3
      %p76 = por %p74, %p75
      %p77 = scmp.ne.s32.totalorder %s66, %s67
      %p78 = scmp.eq.s32.totalorder %s21, 0
      %p79 = por %p77, %p78
      %p80 = scmp.ne.s32.totalorder %s66, %s67
      %p81 = scmp.eq.s32.totalorder %s22, 3
      %p82 = por %p80, %p81
      %p84 = scmp.ne.s32.totalorder %s67, %s83
      %p85 = scmp.eq.s32.totalorder %s22, 0
      %p86 = por %p84, %p85
      %s87 = ssub.s32 1, %s23
      %s88 = smul.u32 %s24, %s87
      %s89 = ssub.s32 1, %s35
      %s90 = smul.u32 %s31, %s89
      %s91 = ssub.s32 %s88, %s90
      %p92 = scmp.eq.s32.totalorder %s91, 0
      %s94 = sadd.s32 %s93, 1
      %s95 = scalar_select %p92, %s93, %s94
      %p98 = pneg %p92
      %p99 = scmp.eq.s32.totalorder %s16, 3
      %p100 = por %p98, %p99
      %p101 = scmp.ne.s32.totalorder %s93, %s96
      %p102 = scmp.eq.s32.totalorder %s16, 0
      %p103 = por %p101, %p102
      %p104 = scmp.ne.s32.totalorder %s93, %s96
      %p105 = scmp.eq.s32.totalorder %s21, 3
      %p106 = por %p104, %p105
      %p107 = scmp.ne.s32.totalorder %s96, %s97
      %p108 = scmp.eq.s32.totalorder %s21, 0
      %p109 = por %p107, %p108
      %p110 = scmp.ne.s32.totalorder %s96, %s97
      %p111 = scmp.eq.s32.totalorder %s22, 3
      %p112 = por %p110, %p111
      %p114 = scmp.ne.s32.totalorder %s97, %s113
      %p115 = scmp.eq.s32.totalorder %s22, 0
      %p116 = por %p114, %p115
      %s117 = smul.u32 %s24, %s23
      %s118 = smul.u32 %s31, %s35
      %s119 = ssub.s32 %s117, %s118
      %p120 = scmp.eq.s32.totalorder %s119, 0
      %s122 = sadd.s32 %s121, 1
      %s123 = scalar_select %p120, %s121, %s122
      %p126 = pneg %p120
      %p127 = scmp.eq.s32.totalorder %s16, 3
      %p128 = por %p126, %p127
      %p129 = scmp.ne.s32.totalorder %s121, %s124
      %p130 = scmp.eq.s32.totalorder %s16, 0
      %p131 = por %p129, %p130
      %p132 = scmp.ne.s32.totalorder %s121, %s124
      %p133 = scmp.eq.s32.totalorder %s21, 3
      %p134 = por %p132, %p133
      %p135 = scmp.ne.s32.totalorder %s124, %s125
      %p136 = scmp.eq.s32.totalorder %s21, 0
      %p137 = por %p135, %p136
      %p138 = scmp.ne.s32.totalorder %s124, %s125
      %p139 = scmp.eq.s32.totalorder %s22, 3
      %p140 = por %p138, %p139
      %p142 = scmp.ne.s32.totalorder %s125, %s141
      %p143 = scmp.eq.s32.totalorder %s22, 0
      %p144 = por %p142, %p143
      %p145 = scmp.le.s32.totalorder 1, %s16
      %p146 = scmp.lt.s32.totalorder %s16, 5
      %p147 = pnand %p145, %p146
      %p148 = pneg %p147
      // Predicated region
      $region9: #{tpu_custom_call.1} parent=5 // pred_check
        _
      $region10: #{tpu_custom_call.1} parent=5 // pred_check_branch
        %150 = sbr.rel (%p147) target = $region12
      $region11: #{tpu_custom_call.1} parent=5 // pred_region
        %s151 = ssub.s32 %s16, 1
        // Predicated region
        $region13: #{tpu_custom_call.1} parent=11 // pred_check
          %p152 = pneg %p49
        $region14: #{tpu_custom_call.1} parent=11 // pred_check_branch
          %154 = sbr.rel (%p152) target = $region16
        $region15: #{tpu_custom_call.1} parent=11 // pred_region
          %156 = vsyncadd [#allocation6], 0
          %s158 = sshll.u32 %s0, 4
          %s159 = int_to_ptr.hbm [resolvable:$true] %s158
          %s160 = sshll.u32 [#allocation5], 4
          %s161 = int_to_ptr.vmem [resolvable:$true] %s160
          %163 = dma.hbm_to_vmem [thread:$0]  %s159, 128, %s161, [#allocation6]
        $region16: #{tpu_custom_call.1} parent=11 // pred_fallthru
          _
      $region12: #{tpu_custom_call.1} parent=5 // pred_fallthru
        _
      %p164 = scmp.lt.s32.totalorder %s16, 4
      // Predicated region
      $region17: #{tpu_custom_call.1} parent=5 // pred_check
        %p165 = pneg %p164
      $region18: #{tpu_custom_call.1} parent=5 // pred_check_branch
        %167 = sbr.rel (%p165) target = $region20
      $region19: #{tpu_custom_call.1} parent=5 // pred_region
        // Predicated region
        $region21: #{tpu_custom_call.1} parent=19 // pred_check
          %p168 = pneg %p73
        $region22: #{tpu_custom_call.1} parent=19 // pred_check_branch
          %170 = sbr.rel (%p168) target = $region24
        $region23: #{tpu_custom_call.1} parent=19 // pred_region
          %s171 = sand.u32 %s16, 1
          %s172 = scalar_lea.sflag [#allocation9], %s171
          %s173 = sand.u32 %s63, 1
          %s174 = smul.addr %s173, 32
          %s175 = scalar_lea.vmem [#allocation8], %s174
          %s176 = ssub.s32 1, %s23
          %s177 = smul.u32 %s24, %s176
          %s178 = smul.u32 2, %s177
          %180 = vsyncadd %s172, 0
          %s181 = smul.addr %s178, 8
          %s182 = scalar_lea.hbm %s1, %s181
          %s183 = sshll.u32 %s182, 4
          %s184 = int_to_ptr.hbm [resolvable:$true] %s183
          %s185 = sshll.u32 %s175, 4
          %s186 = int_to_ptr.vmem [resolvable:$true] %s185
          %191 = dma.hbm_to_vmem [thread:$0]  %s184, 512, %s186, %s172, 512, 256, 16
        $region24: #{tpu_custom_call.1} parent=19 // pred_fallthru
          _
        // Predicated region
        $region25: #{tpu_custom_call.1} parent=19 // pred_check
          %p192 = pneg %p103
        $region26: #{tpu_custom_call.1} parent=19 // pred_check_branch
          %194 = sbr.rel (%p192) target = $region28
        $region27: #{tpu_custom_call.1} parent=19 // pred_region
          %s195 = sand.u32 %s16, 1
          %s196 = scalar_lea.sflag [#allocation9], %s195
          %s197 = sand.u32 %s93, 1
          %s198 = smul.addr %s197, 2
          %s199 = scalar_lea.vmem [#allocation10], %s198
          %s200 = ssub.s32 1, %s23
          %s201 = smul.u32 %s24, %s200
          %s202 = smul.u32 2, %s201
          %204 = vsyncadd %s196, 0
          %s205 = scalar_lea.hbm %s2, %s202
          %s207 = sshll.u32 %s205, 4
          %s208 = int_to_ptr.hbm [resolvable:$true] %s207
          %s209 = sshll.u32 %s199, 4
          %s210 = int_to_ptr.vmem [resolvable:$true] %s209
          %212 = dma.hbm_to_vmem [thread:$0]  %s208, 32, %s210, %s196
        $region28: #{tpu_custom_call.1} parent=19 // pred_fallthru
          _
      $region20: #{tpu_custom_call.1} parent=5 // pred_fallthru
        _
      %p213 = scmp.le.s32.totalorder 1, %s16
      %p214 = scmp.lt.s32.totalorder %s16, 5
      %p215 = pnand %p213, %p214
      %p216 = pneg %p215
      // Predicated region
      $region29: #{tpu_custom_call.1} parent=5 // pred_check
        _
      $region30: #{tpu_custom_call.1} parent=5 // pred_check_branch
        %218 = sbr.rel (%p215) target = $region32
      $region31: #{tpu_custom_call.1} parent=5 // pred_region
        %s219 = ssub.s32 %s16, 1
        // Predicated region
        $region33: #{tpu_custom_call.1} parent=31 // pred_check
          %p220 = pneg %p49
        $region34: #{tpu_custom_call.1} parent=31 // pred_check_branch
          %222 = sbr.rel (%p220) target = $region36
        $region35: #{tpu_custom_call.1} parent=31 // pred_region
          %224 = dma.done [#allocation6], 128
        $region36: #{tpu_custom_call.1} parent=31 // pred_fallthru
          _
        %s225 = sand.u32 %s21, 1
        %s226 = scalar_lea.sflag [#allocation9], %s225
        %s227 = sand.u32 %s66, 1
        %s228 = smul.addr %s227, 32
        %s229 = scalar_lea.vmem [#allocation8], %s228
        // Predicated region
        $region37: #{tpu_custom_call.1} parent=31 // pred_check
          %p230 = pneg %p79
        $region38: #{tpu_custom_call.1} parent=31 // pred_check_branch
          %232 = sbr.rel (%p230) target = $region40
        $region39: #{tpu_custom_call.1} parent=31 // pred_region
          %234 = dma.done %s226, 512
        $region40: #{tpu_custom_call.1} parent=31 // pred_fallthru
          _
        %s235 = sand.u32 %s21, 1
        %s236 = scalar_lea.sflag [#allocation9], %s235
        %s237 = sand.u32 %s96, 1
        %s238 = smul.addr %s237, 2
        %s239 = scalar_lea.vmem [#allocation10], %s238
        // Predicated region
        $region41: #{tpu_custom_call.1} parent=31 // pred_check
          %p240 = pneg %p109
        $region42: #{tpu_custom_call.1} parent=31 // pred_check_branch
          %242 = sbr.rel (%p240) target = $region44
        $region43: #{tpu_custom_call.1} parent=31 // pred_region
          %244 = dma.done %s236, 32
        $region44: #{tpu_custom_call.1} parent=31 // pred_fallthru
          _
        %p245 = pneg %p49
        %p246 = pneg %p46
        %s247 = sand.u32 %s21, 1
        %s248 = scalar_lea.sflag [#allocation9], %s247
        %s249 = sand.u32 %s66, 1
        %s250 = smul.addr %s249, 32
        %s251 = scalar_lea.vmem [#allocation8], %s250
        %p252 = pneg %p79
        %p253 = pneg %p76
        %s254 = sand.u32 %s21, 1
        %s255 = scalar_lea.sflag [#allocation9], %s254
        %s256 = sand.u32 %s96, 1
        %s257 = smul.addr %s256, 2
        %s258 = scalar_lea.vmem [#allocation10], %s257
        %p259 = pneg %p109
        %p260 = pneg %p106
        %p261 = pneg %p137
        %p262 = pneg %p134
        %s263 = sand.u32 %s124, 1
        %s264 = scalar_lea.sflag [#allocation7], %s263
        %s265 = sand.u32 %s124, 1
        %s266 = smul.addr %s265, 16
        %s267 = scalar_lea.vmem [#allocation11], %s266
        %s268 = ssub.s32 1, %s25
        %s269 = smul.u32 %s26, %s268
        %s270 = smul.u32 2, %s269
        %s271 = ssub.s32 1, %s25
        %s272 = smul.u32 %s26, %s271
        %s273 = smul.u32 2, %s272
        %s274 = smul.u32 %s26, %s25
        %s275 = smul.u32 2, %s274
        %p276 = scmp.eq.s32.totalorder %s25, 0
        %p277 = scmp.eq.s32.totalorder %s26, 0
        %p278 = pnand %p276, %p277
        %p279 = pneg %p278
        // Predicated region
        $region45: #{tpu_custom_call.1} parent=31 // pred_check
          _
        $region46: #{tpu_custom_call.1} parent=31 // pred_check_branch
          %281 = sbr.rel (%p278) target = $region48
        $region47: #{tpu_custom_call.1} parent=31 // pred_region
          %vm282 = vcmask 7168
          %283 = vst.msk [vmem:[#allocation3] sm:$0xff] %vm282, -inf
          %284 = vst.msk [vmem:[#allocation4] sm:$0xff] %vm282, 0.0
        $region48: #{tpu_custom_call.1} parent=31 // pred_fallthru
          _
        // Predicated region
        $region49: #{tpu_custom_call.1} parent=31 // pred_check
          %p285 = pneg %p276
        $region50: #{tpu_custom_call.1} parent=31 // pred_check_branch
          %287 = sbr.rel (%p285) target = $region52
        $region51: #{tpu_custom_call.1} parent=31 // pred_region
          %v288 = vld [vmem:[#allocation5] sm:$0xff]
          %v289 = vld [vmem:[%s229] sm:$0xff]
          %v290 = vld [vmem:[%s229 + $0x8] sm:$0xff]
          %v291 = vld [vmem:[%s229 + $0x10] sm:$0xff]
          %v292 = vld [vmem:[%s229 + $0x18] sm:$0xff]
          %v293 = vld [vmem:[%s239] sm:$0x3]
          %v295 = vperm.slane %v293, 0
          %v296 = vperm.slane %v293, 1
          %vm299 = vcmask 130048
          %v301 = vsel %vm299, %v288, 0
          %303 = vmatpush.msra.mxu0 0.0
          %304 = vmatpush.msra.mxu0 0.0
          %305 = vmatpush.msra.mxu0 0.0
          %306 = vmatpush.msra.mxu0 0.0
          %307 = vmatpush.msra.mxu0 0.0
          %308 = vmatpush.msra.mxu0 0.0
          %309 = vmatpush.msra.mxu0 0.0
          %310 = vmatpush.msra.mxu0 0.0
          %311 = vmatpush.msra.mxu0 0.0
          %312 = vmatpush.msra.mxu0 0.0
          %313 = vmatpush.msra.mxu0 0.0
          %314 = vmatpush.msra.mxu0 0.0
          %315 = vmatpush.msra.mxu0 0.0
          %316 = vmatpush.msra.mxu0 0.0
          %317 = vmatpush.msra.mxu0 %v291
          %318 = vmatpush.msra.mxu0 %v289
          %319 = vmatmul.f32.gmra.mxu0 %v301
          %v320 = vpop.f32.mrf.mxu0
          %v321 = vadd.f32 %v295, %v320
          %322 = vdwg.mxu0
          %323 = vmatpush.msra.mxu0 0.0
          %324 = vmatpush.msra.mxu0 0.0
          %325 = vmatpush.msra.mxu0 0.0
          %326 = vmatpush.msra.mxu0 0.0
          %327 = vmatpush.msra.mxu0 0.0
          %328 = vmatpush.msra.mxu0 0.0
          %329 = vmatpush.msra.mxu0 0.0
          %330 = vmatpush.msra.mxu0 0.0
          %331 = vmatpush.msra.mxu0 0.0
          %332 = vmatpush.msra.mxu0 0.0
          %333 = vmatpush.msra.mxu0 0.0
          %334 = vmatpush.msra.mxu0 0.0
          %335 = vmatpush.msra.mxu0 0.0
          %336 = vmatpush.msra.mxu0 0.0
          %337 = vmatpush.msra.mxu0 %v292
          %338 = vmatpush.msra.mxu0 %v290
          %339 = vmatmul.f32.gmra.mxu0 %v301
          %v340 = vpop.f32.mrf.mxu0
          %v341 = vadd.f32 %v296, %v340
          %342 = vdwg.mxu0
          %v343 = vrot.slane %v321, 4
          %v344 = vadd.f32 %v321, %v343
          %v345 = vrot.slane %v344, 2
          %v346 = vadd.f32 %v344, %v345
          %v347 = vrot.slane %v346, 1
          %v348 = vadd.f32 %v346, %v347
          %v349 = vrot.slane %v341, 4
          %v350 = vadd.f32 %v341, %v349
          %v351 = vrot.slane %v350, 2
          %v352 = vadd.f32 %v350, %v351
          %v353 = vrot.slane %v352, 1
          %v354 = vadd.f32 %v352, %v353
          %v355 = vrcp.pop 8.0
          %v356 = vmul.f32 8.0, %v355
          %v357 = vsub.f32 1.0, %v356
          %v358 = vmul.f32 %v355, %v357
          %v359 = vadd.f32 %v355, %v358
          %vm360 = vweird.f32 %v355
          %v361 = vsel %vm360, %v355, %v359
          %v362 = vmul.f32 %v348, %v361
          %v363 = vmul.f32 %v354, %v361
          %v364 = vsub.f32 %v321, %v362
          %v365 = vsub.f32 %v341, %v363
          %v366 = vmul.f32 %v364, %v364
          %v367 = vmul.f32 %v365, %v365
          %v368 = vrot.slane %v366, 4
          %v369 = vadd.f32 %v366, %v368
          %v370 = vrot.slane %v369, 2
          %v371 = vadd.f32 %v369, %v370
          %v372 = vrot.slane %v371, 1
          %v373 = vadd.f32 %v371, %v372
          %v374 = vrot.slane %v367, 4
          %v375 = vadd.f32 %v367, %v374
          %v376 = vrot.slane %v375, 2
          %v377 = vadd.f32 %v375, %v376
          %v378 = vrot.slane %v377, 1
          %v379 = vadd.f32 %v377, %v378
          %v380 = vmul.f32 %v373, %v361
          %v381 = vmul.f32 %v379, %v361
          %v382 = vadd.f32 %v380, 1e-05
          %v383 = vadd.f32 %v381, 1e-05
          %v384 = vrsqrt.pop %v382
          %v385 = vmul.f32 %v384, %v382
          %v386 = vmul.f32 %v385, %v384
          %v387 = vmul.f32 0.5, %v386
          %v388 = vsub.f32 1.5, %v387
          %v389 = vmul.f32 %v384, %v388
          %vm390 = vweird.f32 %v382
          %vm391 = vweird.f32 %v384
          %vm392 = vmor %vm390, %vm391
          %v393 = vsel %vm392, %v384, %v389
          %v394 = vrsqrt.pop %v383
          %v395 = vmul.f32 %v394, %v383
          %v396 = vmul.f32 %v395, %v394
          %v397 = vmul.f32 0.5, %v396
          %v398 = vsub.f32 1.5, %v397
          %v399 = vmul.f32 %v394, %v398
          %vm400 = vweird.f32 %v383
          %vm401 = vweird.f32 %v394
          %vm402 = vmor %vm400, %vm401
          %v403 = vsel %vm402, %v394, %v399
          %v404 = vmul.f32 %v364, %v393
          %v405 = vmul.f32 %v365, %v403
          %s406 = smul.u32 %s26, 2
          %s407 = smul.addr %s406, 8
          %s408 = scalar_lea.vmem [#allocation2], %s407
          %409 = vst [vmem:[%s408] sm:$0xff] %v404
          %410 = vst [vmem:[%s408 + $0x8] sm:$0xff] %v405
          %s411 = smul.u32 %s26, 256
          %v412 = vlaneseq
          %v413 = vand.u32 %v412, 127
          %v414 = vadd.s32 %v413, 128
          %v415 = vstv %s411
          %v416 = vadd.s32 %v415, %v413
          %v417 = vadd.s32 %v415, %v414
          %vm418 = vcmp.lt.s32.totalorder %v416, 384
          %vm419 = vcmp.lt.s32.totalorder %v417, 384
          %v420 = vsel %vm418, %v404, -inf
          %v421 = vsel %vm419, %v405, -inf
          %v422 = vmax.f32 %v420, %v421
          %423 = vmax.xlane.f32.xlu0 %v422
          %v424 = vpop.xlane.xlu0 %423
          %v425 = vld [vmem:[#allocation3] sm:$0xff]
          %v426 = vmax.f32 %v425, %v424
          %v427 = vld [vmem:[#allocation4] sm:$0xff]
          %v428 = vsub.f32 %v425, %v426
          %v429 = vmul.f32 %v428, 1.442695
          %v430 = vpow.pop %v429
          %v431 = vmul.f32 %v427, %v430
          %433 = vset.pattern.permute.xlu0 0
          %434 = vperm.xlu0 %433, %v426
          %v435 = vpop.permute.xlu0 %434
          %v437 = vsub.f32 %v420, %v435
          %v438 = vsub.f32 %v421, %v435
          %v439 = vmul.f32 %v437, 1.442695
          %v440 = vpow.pop %v439
          %v441 = vmul.f32 %v438, 1.442695
          %v442 = vpow.pop %v441
          %v443 = vadd.f32 %v440, %v442
          %444 = vadd.xlane.f32.xlu0 %v443
          %v445 = vpop.xlane.xlu0 %444
          %v446 = vadd.f32 %v431, %v445
          %vm447 = vcmask 7168
          %448 = vst.msk [vmem:[#allocation4] sm:$0xff] %vm447, %v446
          %449 = vst.msk [vmem:[#allocation3] sm:$0xff] %vm447, %v426
          %p450 = scmp.eq.s32.totalorder %s26, 1
          // Predicated region
          $region53: #{tpu_custom_call.1} parent=51 // pred_check
            %p451 = pneg %p450
          $region54: #{tpu_custom_call.1} parent=51 // pred_check_branch
            %453 = sbr.rel (%p451) target = $region56
          $region55: #{tpu_custom_call.1} parent=51 // pred_region
            %v454 = vld [vmem:[#allocation3] sm:$0xff]
            %v455 = vld [vmem:[#allocation4] sm:$0xff]
            %v456 = vlog2.pop %v455
            %v457 = vmul.f32 %v456, 0.6931472
            %v458 = vadd.f32 %v454, %v457
            %459 = vst.msk [vmem:[#allocation3] sm:$0xff] %vm447, %v458
          $region56: #{tpu_custom_call.1} parent=51 // pred_fallthru
            _
        $region52: #{tpu_custom_call.1} parent=31 // pred_fallthru
          _
        %p460 = scmp.eq.s32.totalorder %s25, 1
        // Predicated region
        $region57: #{tpu_custom_call.1} parent=31 // pred_check
          %p461 = pneg %p460
        $region58: #{tpu_custom_call.1} parent=31 // pred_check_branch
          %463 = sbr.rel (%p461) target = $region60
        $region59: #{tpu_custom_call.1} parent=31 // pred_region
          %s464 = smul.u32 %s26, 2
          %s465 = smul.addr %s464, 8
          %s466 = scalar_lea.vmem [#allocation2], %s465
          %v467 = vld [vmem:[%s466] sm:$0xff]
          %v468 = vld [vmem:[%s466 + $0x8] sm:$0xff]
          %v469 = vld [vmem:[#allocation3] sm:$0xff]
          %471 = vset.pattern.permute.xlu0 0
          %472 = vperm.xlu0 %471, %v469
          %v473 = vpop.permute.xlu0 %472
          %v475 = vsub.f32 %v467, %v473
          %v476 = vsub.f32 %v468, %v473
          %477 = vst [vmem:[%s267] sm:$0xff] %v475
          %478 = vst [vmem:[%s267 + $0x8] sm:$0xff] %v476
        $region60: #{tpu_custom_call.1} parent=31 // pred_fallthru
          _
        %s479 = sand.u32 %s124, 1
        %s480 = scalar_lea.sflag [#allocation7], %s479
        %s481 = sand.u32 %s124, 1
        %s482 = smul.addr %s481, 16
        %s483 = scalar_lea.vmem [#allocation11], %s482
        // Predicated region
        $region61: #{tpu_custom_call.1} parent=31 // pred_check
          %p484 = pneg %p134
        $region62: #{tpu_custom_call.1} parent=31 // pred_check_branch
          %486 = sbr.rel (%p484) target = $region64
        $region63: #{tpu_custom_call.1} parent=31 // pred_region
          %s487 = smul.u32 %s26, %s25
          %s488 = smul.u32 2, %s487
          %490 = vsyncadd %s480, 0
          %s491 = smul.addr %s488, 8
          %s492 = scalar_lea.hbm %s3, %s491
          %s494 = sshll.u32 %s483, 4
          %s495 = int_to_ptr.vmem [resolvable:$true] %s494
          %s496 = sshll.u32 %s492, 4
          %s497 = int_to_ptr.hbm [resolvable:$true] %s496
          %499 = dma.vmem_to_hbm [thread:$0]  %s495, 256, %s497, %s480
        $region64: #{tpu_custom_call.1} parent=31 // pred_fallthru
          _
      $region32: #{tpu_custom_call.1} parent=5 // pred_fallthru
        _
      %p500 = scmp.le.s32.totalorder 2, %s16
      // Predicated region
      $region65: #{tpu_custom_call.1} parent=5 // pred_check
        %p501 = pneg %p500
      $region66: #{tpu_custom_call.1} parent=5 // pred_check_branch
        %503 = sbr.rel (%p501) target = $region68
      $region67: #{tpu_custom_call.1} parent=5 // pred_region
        %s504 = ssub.s32 %s16, 2
        // Predicated region
        $region69: #{tpu_custom_call.1} parent=67 // pred_check
          %p505 = pneg %p140
        $region70: #{tpu_custom_call.1} parent=67 // pred_check_branch
          %507 = sbr.rel (%p505) target = $region72
        $region71: #{tpu_custom_call.1} parent=67 // pred_region
          %s508 = sand.u32 %s125, 1
          %s509 = scalar_lea.sflag [#allocation7], %s508
          %s510 = sand.u32 %s125, 1
          %s511 = smul.addr %s510, 16
          %s512 = scalar_lea.vmem [#allocation11], %s511
          %514 = dma.done %s509, 256
        $region72: #{tpu_custom_call.1} parent=67 // pred_fallthru
          _
      $region68: #{tpu_custom_call.1} parent=5 // pred_fallthru
        _
    $region6: #{tpu_custom_call.1} parent=1 // loop_footer
      %s20 = sadd.s32 1, %s16
    $region7: #{tpu_custom_call.1} parent=1 // loop_footer_branch
      %15 = sbr.rel target = $region3
    $region8: #{tpu_custom_call.1} parent=1 // loop_exit
      _
    %515 = vsyncpa [#allocation6], 1
    %s516 = scalar_lea.sflag [#allocation6], 1
    %517 = vsyncpa %s516, 1
    %518 = vsyncpa [#allocation9], 1
    %s519 = scalar_lea.sflag [#allocation9], 1
    %520 = vsyncpa %s519, 1
    %521 = vsyncpa [#allocation7], 1
    %s522 = scalar_lea.sflag [#allocation7], 1
    %523 = vsyncpa %s522, 1

</llo_original>
